<compile_context>
chip_gen: v7x
topology: tpu7x:2x2x1
jax: 0.10.0
libtpu: 0.0.40
codegen_flags: <defaults>
</compile_context>

<pallas_src>
import jax
import jax.numpy as jnp
from jax.experimental import pallas as pl
from jax.experimental.pallas import tpu as pltpu

# ----------------------------- model dims -----------------------------------
N, C_IN, H, W = 2, 4, 16, 16        # input  [2, 4, 16, 16]  (NCHW)
C_MID = 32                           # hidden channels of the head
C_OUT = 8                            # output channels ('out' of the dict)
LANE = 128                           # TPU lane width


# ----------------------------- Pallas kernel --------------------------------
def head_kernel(x_ref, w1_ref, b1_ref, w2_ref, b2_ref, o_ref):
    """Fused pointwise head, channel-major: o = W2 @ relu(W1 @ x + b1) + b2.

    x_ref : (C_IN,  P)   one image's pixels, lane axis = P (multiple of 128)
    w1_ref: (C_MID, C_IN)   conv-layout weight (resident across grid)
    b1_ref: (C_MID, 1)
    w2_ref: (C_OUT, C_MID)
    b2_ref: (C_OUT, 1)
    o_ref : (C_OUT, P)
    """
    x = x_ref[...]                                                 # (C_IN, P)
    h = jnp.dot(w1_ref[...], x, preferred_element_type=jnp.float32)
    h = jnp.maximum(h + b1_ref[...], 0.0)                          # bias + ReLU (VPU)
    o = jnp.dot(w2_ref[...], h, preferred_element_type=jnp.float32)
    o_ref[...] = (o + b2_ref[...]).astype(o_ref.dtype)             # (C_OUT, P)


@jax.jit
def pointwise_head(x_ncp, w1, b1, w2, b2):
    """x_ncp: (N, C_IN, P) f32 -> (N, C_OUT, P) f32 via one fused Pallas kernel."""
    n, c_in, p = x_ncp.shape
    # Pad the lane (pixel) axis to a multiple of 128 only if needed
    # (no-op for H*W = 256).  Keeps stores unmasked / lane-dense.
    p_pad = p if p % LANE == 0 else ((p + LANE - 1) // LANE) * LANE
    if p_pad != p:
        x_ncp = jnp.pad(x_ncp, ((0, 0), (0, 0), (0, p_pad - p)))

    out = pl.pallas_call(
        head_kernel,
        out_shape=jax.ShapeDtypeStruct((n, C_OUT, p_pad), jnp.float32),
        grid_spec=pltpu.PrefetchScalarGridSpec(
            num_scalar_prefetch=0,
            grid=(n,),                                     # one step per image
            in_specs=[
                pl.BlockSpec((None, c_in, p_pad), lambda b: (b, 0, 0)),   # x slab
                pl.BlockSpec((C_MID, c_in),       lambda b: (0, 0)),      # w1 (resident)
                pl.BlockSpec((C_MID, 1),          lambda b: (0, 0)),      # b1
                pl.BlockSpec((C_OUT, C_MID),      lambda b: (0, 0)),      # w2
                pl.BlockSpec((C_OUT, 1),          lambda b: (0, 0)),      # b2
            ],
            out_specs=pl.BlockSpec((None, C_OUT, p_pad), lambda b: (b, 0, 0)),
        ),
        compiler_params=pltpu.CompilerParams(
            dimension_semantics=("parallel",)),            # even split on v7x's 2 TCs
    )(x_ncp, w1, b1, w2, b2)

    if p_pad != p:
        out = out[:, :, :p]
    return out


# ----------------------------- inner "model" --------------------------------
def inner_model(x_nchw, params):
    """Segmentation-style inner model; returns a dict with key 'out' (NCHW)."""
    n, c, h, w = x_nchw.shape
    x_ncp = x_nchw.reshape(n, c, h * w)        # NCHW -> (N, C, H*W): reshape only
    out_ncp = pointwise_head(x_ncp, params["w1"], params["b1"],
                             params["w2"], params["b2"])
    return {"out": out_ncp.reshape(n, C_OUT, h, w)}   # back to NCHW, reshape only


def custom_model_forward(x_nchw, params):
    """Mirror of CustomModel.forward: call inner model, unwrap dict['out']."""
    output = inner_model(x_nchw, params)
    if isinstance(output, dict):
        output = output["out"]
    return output


# ----------------------------- reference (pure JAX) --------------------------
def reference_forward(x_nchw, params):
    n, c, h, w = x_nchw.shape
    x = x_nchw.reshape(n, c, h * w)
    hid = jnp.maximum(
        jnp.einsum("mc,bcp->bmp", params["w1"], x) + params["b1"][None, :, :], 0.0)
    o = jnp.einsum("om,bmp->bop", params["w2"], hid) + params["b2"][None, :, :]
    return o.reshape(n, C_OUT, h, w)


# ----------------------------- main ------------------------------------------
if __name__ == "__main__":
    key = jax.random.PRNGKey(0)
    k_x, k_w1, k_b1, k_w2, k_b2 = jax.random.split(key, 5)

    x = jax.random.normal(k_x, (N, C_IN, H, W), dtype=jnp.float32)

    # deterministic synthetic parameters, stored in PyTorch 1x1-conv layout
    # (C_out, C_in) so the channel-major kernel needs no transposes at all.
    params = {
        "w1": jax.random.normal(k_w1, (C_MID, C_IN), dtype=jnp.float32) * 0.1,
        "b1": jax.random.normal(k_b1, (C_MID, 1), dtype=jnp.float32) * 0.01,
        "w2": jax.random.normal(k_w2, (C_OUT, C_MID), dtype=jnp.float32) * 0.1,
        "b2": jax.random.normal(k_b2, (C_OUT, 1), dtype=jnp.float32) * 0.01,
    }

    out = custom_model_forward(x, params)
    out = jax.block_until_ready(out)

    ref = reference_forward(x, params)
    assert out.shape == (N, C_OUT, H, W), out.shape
    assert jnp.allclose(out, ref, atol=1e-5, rtol=1e-5), "mismatch vs. JAX reference"

    print("KERNEL_OK")
</pallas_src>

<mosaic_0001>
module attributes {stable_mosaic.version = 11 : i64} {
  func.func @head_kernel(%arg0: i32, %arg1: memref<1x4x256xf32, #tpu.memory_space<vmem>>, %arg2: memref<32x4xf32, #tpu.memory_space<vmem>>, %arg3: memref<32x1xf32, #tpu.memory_space<vmem>>, %arg4: memref<8x32xf32, #tpu.memory_space<vmem>>, %arg5: memref<8x1xf32, #tpu.memory_space<vmem>>, %arg6: memref<1x8x256xf32, #tpu.memory_space<vmem>>) attributes {dimension_semantics = [#tpu.dimension_semantics<parallel>], iteration_bounds = array<i64: 2>, scalar_prefetch = 0 : i64, scratch_operands = 0 : i64, tpu.core_type = #tpu.core_type<tc>, window_params = [{transform_indices = @transform_0, window_bounds = array<i64: 1, 4, 256>}, {pipeline_mode = #tpu.pipeline_mode<synchronous>, transform_indices = @transform_1, window_bounds = array<i64: 32, 4>}, {pipeline_mode = #tpu.pipeline_mode<synchronous>, transform_indices = @transform_2, window_bounds = array<i64: 32, 1>}, {pipeline_mode = #tpu.pipeline_mode<synchronous>, transform_indices = @transform_3, window_bounds = array<i64: 8, 32>}, {pipeline_mode = #tpu.pipeline_mode<synchronous>, transform_indices = @transform_4, window_bounds = array<i64: 8, 1>}, {transform_indices = @transform_5, window_bounds = array<i64: 1, 8, 256>}]} {
    %c0 = arith.constant 0 : index
    %c0_0 = arith.constant 0 : index
    %c0_1 = arith.constant 0 : index
    %0 = vector.load %arg1[%c0, %c0_0, %c0_1] : memref<1x4x256xf32, #tpu.memory_space<vmem>>, vector<1x4x256xf32>
    %1 = vector.shape_cast %0 : vector<1x4x256xf32> to vector<4x256xf32>
    %c0_2 = arith.constant 0 : index
    %c0_3 = arith.constant 0 : index
    %2 = vector.load %arg2[%c0_2, %c0_3] : memref<32x4xf32, #tpu.memory_space<vmem>>, vector<32x4xf32>
    %cst = arith.constant dense<0.000000e+00> : vector<32x256xf32>
    %3 = tpu.matmul %2, %1, %cst {dimension_numbers = #tpu.dot_dimension_numbers<[1], [0], [0], [1], [0, 0, 1, 1], [], []>} : vector<32x4xf32>, vector<4x256xf32>, vector<32x256xf32> -> vector<32x256xf32>
    %c0_4 = arith.constant 0 : index
    %c0_5 = arith.constant 0 : index
    %4 = vector.load %arg3[%c0_4, %c0_5] : memref<32x1xf32, #tpu.memory_space<vmem>>, vector<32x1xf32>
    %5 = vector.broadcast %4 : vector<32x1xf32> to vector<32x256xf32>
    %6 = arith.addf %3, %5 : vector<32x256xf32>
    %cst_6 = arith.constant 0.000000e+00 : f32
    %7 = vector.broadcast %cst_6 : f32 to vector<32x256xf32>
    %8 = arith.maximumf %6, %7 : vector<32x256xf32>
    %c0_7 = arith.constant 0 : index
    %c0_8 = arith.constant 0 : index
    %9 = vector.load %arg4[%c0_7, %c0_8] : memref<8x32xf32, #tpu.memory_space<vmem>>, vector<8x32xf32>
    %cst_9 = arith.constant dense<0.000000e+00> : vector<8x256xf32>
    %10 = tpu.matmul %9, %8, %cst_9 {dimension_numbers = #tpu.dot_dimension_numbers<[1], [0], [0], [1], [0, 0, 1, 1], [], []>} : vector<8x32xf32>, vector<32x256xf32>, vector<8x256xf32> -> vector<8x256xf32>
    %c0_10 = arith.constant 0 : index
    %c0_11 = arith.constant 0 : index
    %11 = vector.load %arg5[%c0_10, %c0_11] : memref<8x1xf32, #tpu.memory_space<vmem>>, vector<8x1xf32>
    %12 = vector.broadcast %11 : vector<8x1xf32> to vector<8x256xf32>
    %13 = arith.addf %10, %12 : vector<8x256xf32>
    %c0_12 = arith.constant 0 : index
    %c0_13 = arith.constant 0 : index
    %c0_14 = arith.constant 0 : index
    %14 = vector.load %arg6[%c0_12, %c0_13, %c0_14] : memref<1x8x256xf32, #tpu.memory_space<vmem>>, vector<1x8x256xf32>
    %15 = vector.shape_cast %14 : vector<1x8x256xf32> to vector<8x256xf32>
    %16 = vector.shape_cast %13 : vector<8x256xf32> to vector<1x8x256xf32>
    tpu.vector_store %arg6[%c0_12, %c0_13, %c0_14], %16 {strides = array<i32>} : memref<1x8x256xf32, #tpu.memory_space<vmem>>, vector<1x8x256xf32>,
    return
  }
  func.func @transform_0(%arg0: i32) -> (i32, i32, i32) {
    %c0_i32 = arith.constant 0 : i32
    %c0_i32_0 = arith.constant 0 : i32
    %c0_i32_1 = arith.constant 0 : i32
    return %arg0, %c0_i32, %c0_i32_0 : i32, i32, i32
  }
  func.func @transform_1(%arg0: i32) -> (i32, i32) {
    %c0_i32 = arith.constant 0 : i32
    %c0_i32_0 = arith.constant 0 : i32
    %c0_i32_1 = arith.constant 0 : i32
    return %c0_i32, %c0_i32_0 : i32, i32
  }
  func.func @transform_2(%arg0: i32) -> (i32, i32) {
    %c0_i32 = arith.constant 0 : i32
    %c0_i32_0 = arith.constant 0 : i32
    %c0_i32_1 = arith.constant 0 : i32
    return %c0_i32, %c0_i32_0 : i32, i32
  }
  func.func @transform_3(%arg0: i32) -> (i32, i32) {
    %c0_i32 = arith.constant 0 : i32
    %c0_i32_0 = arith.constant 0 : i32
    %c0_i32_1 = arith.constant 0 : i32
    return %c0_i32, %c0_i32_0 : i32, i32
  }
  func.func @transform_4(%arg0: i32) -> (i32, i32) {
    %c0_i32 = arith.constant 0 : i32
    %c0_i32_0 = arith.constant 0 : i32
    %c0_i32_1 = arith.constant 0 : i32
    return %c0_i32, %c0_i32_0 : i32, i32
  }
  func.func @transform_5(%arg0: i32) -> (i32, i32, i32) {
    %c0_i32 = arith.constant 0 : i32
    %c0_i32_0 = arith.constant 0 : i32
    %c0_i32_1 = arith.constant 0 : i32
    return %arg0, %c0_i32, %c0_i32_0 : i32, i32, i32
  }
}

</mosaic_0001>

<llo_original>
// kernel: pointwise_head.1
$region0: #{pointwise_head.1}
  #allocation0 [shape = 'u32[]', space=smem, size = 0x4, offset = 0x4, fixed_abs, tag = 'smem constant byte address 0x4 - core index']
  #allocation1 [shape = 'u32[144,128]{1,0:T(1,128)}', space=vmem, size = 0x12000, scoped, tag = 'internal scratch']
  %s0 = inlined_call_operand.vmem [shape: f32[2,4,256], index: 0, kind: input, shape index: {}]
  %s1 = inlined_call_operand.vmem [shape: f32[32,4], index: 1, kind: input, shape index: {}]
  %s2 = inlined_call_operand.vmem [shape: f32[32,1], index: 2, kind: input, shape index: {}]
  %s3 = inlined_call_operand.vmem [shape: f32[8,32], index: 3, kind: input, shape index: {}]
  %s4 = inlined_call_operand.vmem [shape: f32[8,1], index: 4, kind: input, shape index: {}]
  %s5 = inlined_call_operand.hbm [shape: f32[2,8,256], index: 5, kind: output, shape index: {}]
  %s6 = sld [smem:[#allocation0]]
  $region53: #{pointwise_head.1} parent=0
    _
  %s8 = ssub.s32 1, %s6
  %s9 = scalar_select 0, %s8, %s6
  $region1: #{pointwise_head.1} parent=0
    #allocation2 [shape = 'u8[16384]{0}', space=vmem, size = 0x4000, scoped, tag = 'output window, operand 0']
    #allocation3 [shape = 's32[2]{0}', space=sflag, size = 0x8, scoped, tag = 'scoped memory for pointwise_head.1']
    %10 = vsyncpa [#allocation3], 0
    %s11 = scalar_lea.sflag [#allocation3], 1
    %12 = vsyncpa %s11, 0
    loop: start=0, step=1, limit=4
    $region2: #{pointwise_head.1} parent=1 // loop_pre_header
      _
    $region3: #{pointwise_head.1} parent=1 // loop_header
      %s14 = sphi 0, %s18
      %p15 = scmp.ge.s32.totalorder %s14, 4
      %s24 = sphi 0, %s26
      %s27 = sphi 0, %s24
      %s28 = sphi 0, %s27
      %s44 = sphi 0, %s28
      %s48 = sphi 0, %s48
      %s50 = sphi 0, %s48
      %s51 = sphi 0, %s50
      %s65 = sphi 0, %s51
      %s69 = sphi 0, %s69
      %s71 = sphi 0, %s69
      %s72 = sphi 0, %s71
      %s86 = sphi 0, %s72
      %s90 = sphi 0, %s90
      %s92 = sphi 0, %s90
      %s93 = sphi 0, %s92
      %s107 = sphi 0, %s93
      %s111 = sphi 0, %s111
      %s113 = sphi 0, %s111
      %s114 = sphi 0, %s113
      %s128 = sphi 0, %s114
      %s134 = sphi 0, %s136
      %s137 = sphi 0, %s134
      %s138 = sphi 0, %s137
      %s154 = sphi 0, %s138
    $region4: #{pointwise_head.1} parent=1 // loop_header_branch
      %17 = sbr.rel (%p15) target = $region8
    $region5: #{pointwise_head.1} parent=1 // loop_body
      %s19 = ssub.s32 %s14, 1
      %s20 = ssub.s32 %s14, 2
      %s21 = sadd.s32 %s14, 1
      %s22 = ssub.s32 %s14, %s21
      %p23 = scmp.eq.s32.totalorder %s22, 0
      %s25 = sadd.s32 %s24, 1
      %s26 = scalar_select %p23, %s24, %s25
      %p29 = pneg %p23
      %p30 = scmp.eq.s32.totalorder %s14, 1
      %p31 = por %p29, %p30
      %p32 = scmp.ne.s32.totalorder %s24, %s27
      %p33 = scmp.eq.s32.totalorder %s14, 0
      %p34 = por %p32, %p33
      %p35 = scmp.ne.s32.totalorder %s24, %s27
      %p36 = scmp.eq.s32.totalorder %s19, 1
      %p37 = por %p35, %p36
      %p38 = scmp.ne.s32.totalorder %s27, %s28
      %p39 = scmp.eq.s32.totalorder %s19, 0
      %p40 = por %p38, %p39
      %p41 = scmp.ne.s32.totalorder %s27, %s28
      %p42 = scmp.eq.s32.totalorder %s20, 1
      %p43 = por %p41, %p42
      %p45 = scmp.ne.s32.totalorder %s28, %s44
      %p46 = scmp.eq.s32.totalorder %s20, 0
      %p47 = por %p45, %p46
      %s49 = sadd.s32 %s48, 1
      %p52 = scmp.eq.s32.totalorder %s14, 1
      %p53 = scmp.ne.s32.totalorder %s48, %s50
      %p54 = scmp.eq.s32.totalorder %s14, 0
      %p55 = por %p53, %p54
      %p56 = scmp.ne.s32.totalorder %s48, %s50
      %p57 = scmp.eq.s32.totalorder %s19, 1
      %p58 = por %p56, %p57
      %p59 = scmp.ne.s32.totalorder %s50, %s51
      %p60 = scmp.eq.s32.totalorder %s19, 0
      %p61 = por %p59, %p60
      %p62 = scmp.ne.s32.totalorder %s50, %s51
      %p63 = scmp.eq.s32.totalorder %s20, 1
      %p64 = por %p62, %p63
      %p66 = scmp.ne.s32.totalorder %s51, %s65
      %p67 = scmp.eq.s32.totalorder %s20, 0
      %p68 = por %p66, %p67
      %s70 = sadd.s32 %s69, 1
      %p73 = scmp.eq.s32.totalorder %s14, 1
      %p74 = scmp.ne.s32.totalorder %s69, %s71
      %p75 = scmp.eq.s32.totalorder %s14, 0
      %p76 = por %p74, %p75
      %p77 = scmp.ne.s32.totalorder %s69, %s71
      %p78 = scmp.eq.s32.totalorder %s19, 1
      %p79 = por %p77, %p78
      %p80 = scmp.ne.s32.totalorder %s71, %s72
      %p81 = scmp.eq.s32.totalorder %s19, 0
      %p82 = por %p80, %p81
      %p83 = scmp.ne.s32.totalorder %s71, %s72
      %p84 = scmp.eq.s32.totalorder %s20, 1
      %p85 = por %p83, %p84
      %p87 = scmp.ne.s32.totalorder %s72, %s86
      %p88 = scmp.eq.s32.totalorder %s20, 0
      %p89 = por %p87, %p88
      %s91 = sadd.s32 %s90, 1
      %p94 = scmp.eq.s32.totalorder %s14, 1
      %p95 = scmp.ne.s32.totalorder %s90, %s92
      %p96 = scmp.eq.s32.totalorder %s14, 0
      %p97 = por %p95, %p96
      %p98 = scmp.ne.s32.totalorder %s90, %s92
      %p99 = scmp.eq.s32.totalorder %s19, 1
      %p100 = por %p98, %p99
      %p101 = scmp.ne.s32.totalorder %s92, %s93
      %p102 = scmp.eq.s32.totalorder %s19, 0
      %p103 = por %p101, %p102
      %p104 = scmp.ne.s32.totalorder %s92, %s93
      %p105 = scmp.eq.s32.totalorder %s20, 1
      %p106 = por %p104, %p105
      %p108 = scmp.ne.s32.totalorder %s93, %s107
      %p109 = scmp.eq.s32.totalorder %s20, 0
      %p110 = por %p108, %p109
      %s112 = sadd.s32 %s111, 1
      %p115 = scmp.eq.s32.totalorder %s14, 1
      %p116 = scmp.ne.s32.totalorder %s111, %s113
      %p117 = scmp.eq.s32.totalorder %s14, 0
      %p118 = por %p116, %p117
      %p119 = scmp.ne.s32.totalorder %s111, %s113
      %p120 = scmp.eq.s32.totalorder %s19, 1
      %p121 = por %p119, %p120
      %p122 = scmp.ne.s32.totalorder %s113, %s114
      %p123 = scmp.eq.s32.totalorder %s19, 0
      %p124 = por %p122, %p123
      %p125 = scmp.ne.s32.totalorder %s113, %s114
      %p126 = scmp.eq.s32.totalorder %s20, 1
      %p127 = por %p125, %p126
      %p129 = scmp.ne.s32.totalorder %s114, %s128
      %p130 = scmp.eq.s32.totalorder %s20, 0
      %p131 = por %p129, %p130
      %s132 = ssub.s32 %s14, %s21
      %p133 = scmp.eq.s32.totalorder %s132, 0
      %s135 = sadd.s32 %s134, 1
      %s136 = scalar_select %p133, %s134, %s135
      %p139 = pneg %p133
      %p140 = scmp.eq.s32.totalorder %s14, 1
      %p141 = por %p139, %p140
      %p142 = scmp.ne.s32.totalorder %s134, %s137
      %p143 = scmp.eq.s32.totalorder %s14, 0
      %p144 = por %p142, %p143
      %p145 = scmp.ne.s32.totalorder %s134, %s137
      %p146 = scmp.eq.s32.totalorder %s19, 1
      %p147 = por %p145, %p146
      %p148 = scmp.ne.s32.totalorder %s137, %s138
      %p149 = scmp.eq.s32.totalorder %s19, 0
      %p150 = por %p148, %p149
      %p151 = scmp.ne.s32.totalorder %s137, %s138
      %p152 = scmp.eq.s32.totalorder %s20, 1
      %p153 = por %p151, %p152
      %p155 = scmp.ne.s32.totalorder %s138, %s154
      %p156 = scmp.eq.s32.totalorder %s20, 0
      %p157 = por %p155, %p156
      %p158 = scmp.le.s32.totalorder 1, %s14
      %p159 = scmp.lt.s32.totalorder %s14, 3
      %p160 = pnand %p158, %p159
      %p161 = pneg %p160
      // Predicated region
      $region9: #{pointwise_head.1} parent=5 // pred_check
        _
      $region10: #{pointwise_head.1} parent=5 // pred_check_branch
        %163 = sbr.rel (%p160) target = $region12
      $region11: #{pointwise_head.1} parent=5 // pred_region
        %s164 = ssub.s32 %s14, 1
        // Predicated region
        $region13: #{pointwise_head.1} parent=11 // pred_check
          %p165 = pneg %p61
        $region14: #{pointwise_head.1} parent=11 // pred_check_branch
          %167 = sbr.rel (%p165) target = $region16
        $region15: #{pointwise_head.1} parent=11 // pred_region
          _
        $region16: #{pointwise_head.1} parent=11 // pred_fallthru
          _
        // Predicated region
        $region17: #{pointwise_head.1} parent=11 // pred_check
          %p168 = pneg %p82
        $region18: #{pointwise_head.1} parent=11 // pred_check_branch
          %170 = sbr.rel (%p168) target = $region20
        $region19: #{pointwise_head.1} parent=11 // pred_region
          _
        $region20: #{pointwise_head.1} parent=11 // pred_fallthru
          _
        // Predicated region
        $region21: #{pointwise_head.1} parent=11 // pred_check
          %p171 = pneg %p103
        $region22: #{pointwise_head.1} parent=11 // pred_check_branch
          %173 = sbr.rel (%p171) target = $region24
        $region23: #{pointwise_head.1} parent=11 // pred_region
          _
        $region24: #{pointwise_head.1} parent=11 // pred_fallthru
          _
        // Predicated region
        $region25: #{pointwise_head.1} parent=11 // pred_check
          %p174 = pneg %p124
        $region26: #{pointwise_head.1} parent=11 // pred_check_branch
          %176 = sbr.rel (%p174) target = $region28
        $region27: #{pointwise_head.1} parent=11 // pred_region
          _
        $region28: #{pointwise_head.1} parent=11 // pred_fallthru
          _
      $region12: #{pointwise_head.1} parent=5 // pred_fallthru
        _
      %p177 = scmp.lt.s32.totalorder %s14, 2
      // Predicated region
      $region29: #{pointwise_head.1} parent=5 // pred_check
        %p178 = pneg %p177
      $region30: #{pointwise_head.1} parent=5 // pred_check_branch
        %180 = sbr.rel (%p178) target = $region32
      $region31: #{pointwise_head.1} parent=5 // pred_region
        // Predicated region
        $region33: #{pointwise_head.1} parent=31 // pred_check
          %p181 = pneg %p34
        $region34: #{pointwise_head.1} parent=31 // pred_check_branch
          %183 = sbr.rel (%p181) target = $region36
        $region35: #{pointwise_head.1} parent=31 // pred_region
          %p184 = scmp.lt.s32.totalorder %s14, 1
          %s185 = scalar_select %p184, %s14, 1
          %s186 = smul.addr %s185, 2
          %s187 = smul.addr %s186, 4
          %s188 = scalar_lea.vmem %s0, %s187
        $region36: #{pointwise_head.1} parent=31 // pred_fallthru
          _
      $region32: #{pointwise_head.1} parent=5 // pred_fallthru
        _
      %p189 = scmp.le.s32.totalorder 1, %s14
      %p190 = scmp.lt.s32.totalorder %s14, 3
      %p191 = pnand %p189, %p190
      %p192 = pneg %p191
      // Predicated region
      $region37: #{pointwise_head.1} parent=5 // pred_check
        _
      $region38: #{pointwise_head.1} parent=5 // pred_check_branch
        %194 = sbr.rel (%p191) target = $region40
      $region39: #{pointwise_head.1} parent=5 // pred_region
        %s195 = ssub.s32 %s14, 1
        %p196 = scmp.lt.s32.totalorder %s19, 1
        %s197 = scalar_select %p196, %s19, 1
        %s198 = smul.addr %s197, 2
        %s199 = smul.addr %s198, 4
        %s200 = scalar_lea.vmem %s0, %s199
        %p201 = pneg %p40
        %p202 = pneg %p37
        %p203 = pneg %p61
        %p204 = pneg %p58
        %p205 = pneg %p82
        %p206 = pneg %p79
        %p207 = pneg %p103
        %p208 = pneg %p100
        %p209 = pneg %p124
        %p210 = pneg %p121
        %p211 = pneg %p150
        %p212 = pneg %p147
        %s213 = sand.u32 %s137, 1
        %s214 = scalar_lea.sflag [#allocation3], %s213
        %s215 = sand.u32 %s137, 1
        %s216 = smul.addr %s215, 16
        %s217 = scalar_lea.vmem [#allocation2], %s216
        %p218 = scmp.lt.s32.totalorder %s19, 1
        %s219 = scalar_select %p218, %s19, 1
        %s220 = smul.addr %s219, 2
        %s221 = smul.addr %s220, 4
        %s222 = scalar_lea.vmem %s0, %s221
        %v223 = vld [vmem:[%s222] sm:$0xff]
        %v224 = vld [vmem:[%s1] sm:$0xff]
        %v225 = vld [vmem:[%s1 + $0x8] sm:$0xff]
        %v226 = vld [vmem:[%s1 + $0x10] sm:$0xff]
        %v227 = vld [vmem:[%s1 + $0x18] sm:$0xff]
        %v228 = vld [vmem:[%s2] sm:$0xff]
        %v229 = vld [vmem:[%s2 + $0x8] sm:$0xff]
        %v230 = vld [vmem:[%s2 + $0x10] sm:$0xff]
        %v231 = vld [vmem:[%s2 + $0x18] sm:$0xff]
        %233 = vset.pattern.permute.xlu0 0
        %234 = vperm.xlu0 %233, %v228
        %v235 = vpop.permute.xlu0 %234
        %238 = vset.pattern.permute.xlu0 0
        %239 = vperm.xlu0 %238, %v229
        %v240 = vpop.permute.xlu0 %239
        %243 = vset.pattern.permute.xlu0 0
        %244 = vperm.xlu0 %243, %v230
        %v245 = vpop.permute.xlu0 %244
        %248 = vset.pattern.permute.xlu0 0
        %249 = vperm.xlu0 %248, %v231
        %v250 = vpop.permute.xlu0 %249
        %v253 = vcombine.high %v223, %v223
        %vm254 = vcmask 31744
        %v256 = vsel %vm254, %v224, 0
        %v259 = vsel %vm254, %v225, 0
        %v262 = vsel %vm254, %v226, 0
        %v265 = vsel %vm254, %v227, 0
        %vm267 = vcmask 1043456
        %v268 = vsel %vm267, %v223, 0
        %v270 = vsel %vm267, %v253, 0
        %272 = vmatprep.subr.mxu0 %v270
        %273 = vmatpush1.msra.mxu0 %v268
        %274 = vmatprep.subr.mxu0 0.0
        %275 = vmatpush1.msra.mxu0 0.0
        %276 = vmatprep.subr.mxu0 0.0
        %277 = vmatpush1.msra.mxu0 0.0
        %278 = vmatprep.subr.mxu0 0.0
        %279 = vmatpush1.msra.mxu0 0.0
        %280 = vmatprep.subr.mxu0 0.0
        %281 = vmatpush1.msra.mxu0 0.0
        %282 = vmatprep.subr.mxu0 0.0
        %283 = vmatpush1.msra.mxu0 0.0
        %284 = vmatprep.subr.mxu0 0.0
        %285 = vmatpush1.msra.mxu0 0.0
        %286 = vmatprep.subr.mxu0 0.0
        %287 = vmatpush1.msra.mxu0 0.0
        %288 = vmatprep.subr.mxu0 0.0
        %289 = vmatpush1.msra.mxu0 0.0
        %290 = vmatprep.subr.mxu0 0.0
        %291 = vmatpush1.msra.mxu0 0.0
        %292 = vmatprep.subr.mxu0 0.0
        %293 = vmatpush1.msra.mxu0 0.0
        %294 = vmatprep.subr.mxu0 0.0
        %295 = vmatpush1.msra.mxu0 0.0
        %296 = vmatprep.subr.mxu0 0.0
        %297 = vmatpush1.msra.mxu0 0.0
        %298 = vmatprep.subr.mxu0 0.0
        %299 = vmatpush1.msra.mxu0 0.0
        %300 = vmatprep.subr.mxu0 0.0
        %301 = vmatpush1.msra.mxu0 0.0
        %302 = vmatprep.subr.mxu0 0.0
        %303 = vmatpush1.msra.mxu0 0.0
        %304 = vmatprep.subr.mxu0 0.0
        %305 = vmatpush1.msra.mxu0 0.0
        %306 = vmatprep.subr.mxu0 0.0
        %307 = vmatpush1.msra.mxu0 0.0
        %308 = vmatprep.subr.mxu0 0.0
        %309 = vmatpush1.msra.mxu0 0.0
        %310 = vmatprep.subr.mxu0 0.0
        %311 = vmatpush1.msra.mxu0 0.0
        %312 = vmatprep.subr.mxu0 0.0
        %313 = vmatpush1.msra.mxu0 0.0
        %314 = vmatprep.subr.mxu0 0.0
        %315 = vmatpush1.msra.mxu0 0.0
        %316 = vmatprep.subr.mxu0 0.0
        %317 = vmatpush1.msra.mxu0 0.0
        %318 = vmatprep.subr.mxu0 0.0
        %319 = vmatpush1.msra.mxu0 0.0
        %320 = vmatprep.subr.mxu0 0.0
        %321 = vmatpush1.msra.mxu0 0.0
        %322 = vmatprep.subr.mxu0 0.0
        %323 = vmatpush1.msra.mxu0 0.0
        %324 = vmatprep.subr.mxu0 0.0
        %325 = vmatpush1.msra.mxu0 0.0
        %326 = vmatprep.subr.mxu0 0.0
        %327 = vmatpush1.msra.mxu0 0.0
        %328 = vmatprep.subr.mxu0 0.0
        %329 = vmatpush1.msra.mxu0 0.0
        %330 = vmatprep.subr.mxu0 0.0
        %331 = vmatpush1.msra.mxu0 0.0
        %332 = vmatprep.subr.mxu0 0.0
        %333 = vmatpush1.msra.mxu0 0.0
        %334 = vmatprep.subr.mxu0 0.0
        %335 = vmatpush1.msra.mxu0 0.0
        %336 = vmatprep.mubr.f32.mxu0 0.0
        %337 = vmatmul.mubr.f32.gmra.mrb[0].mxu0 %v256
        %v338 = vpop.f32.mrb[0].mxu0
        %v339 = vadd.f32 %v235, %v338
        %v340 = vpop.f32.mrb[0].mxu0
        %v341 = vadd.f32 %v235, %v340
        %342 = vmatprep.mubr.f32.mxu0 0.0
        %343 = vmatmul.mubr.f32.gmra.mrb[0].mxu0 %v259
        %v344 = vpop.f32.mrb[0].mxu0
        %v345 = vadd.f32 %v240, %v344
        %v346 = vpop.f32.mrb[0].mxu0
        %v347 = vadd.f32 %v240, %v346
        %348 = vmatprep.mubr.f32.mxu0 0.0
        %349 = vmatmul.mubr.f32.gmra.mrb[0].mxu0 %v262
        %v350 = vpop.f32.mrb[0].mxu0
        %v351 = vadd.f32 %v245, %v350
        %v352 = vpop.f32.mrb[0].mxu0
        %v353 = vadd.f32 %v245, %v352
        %354 = vmatprep.mubr.f32.mxu0 0.0
        %355 = vmatmul.mubr.f32.gmra.mrb[0].mxu0 %v265
        %v356 = vpop.f32.mrb[0].mxu0
        %v357 = vadd.f32 %v250, %v356
        %v358 = vpop.f32.mrb[0].mxu0
        %v359 = vadd.f32 %v250, %v358
        %360 = vdwg.mxu0
        %v361 = vmax.f32 %v339, 0.0
        %v362 = vmax.f32 %v341, 0.0
        %v363 = vmax.f32 %v345, 0.0
        %v364 = vmax.f32 %v347, 0.0
        %v365 = vmax.f32 %v351, 0.0
        %v366 = vmax.f32 %v353, 0.0
        %v367 = vmax.f32 %v357, 0.0
        %v368 = vmax.f32 %v359, 0.0
        %v369 = vld [vmem:[%s3] sm:$0xff]
        %v370 = vld [vmem:[%s4] sm:$0xff]
        %372 = vset.pattern.permute.xlu0 0
        %373 = vperm.xlu0 %372, %v370
        %v374 = vpop.permute.xlu0 %373
        %vm376 = vcmask 261120
        %v378 = vsel %vm376, %v369, 0
        %380 = vmatprep.subr.mxu0 %v362
        %381 = vmatpush1.msra.mxu0 %v361
        %382 = vmatprep.subr.mxu0 %v364
        %383 = vmatpush1.msra.mxu0 %v363
        %384 = vmatprep.subr.mxu0 %v366
        %385 = vmatpush1.msra.mxu0 %v365
        %386 = vmatprep.subr.mxu0 %v368
        %387 = vmatpush1.msra.mxu0 %v367
        %388 = vmatprep.subr.mxu0 0.0
        %389 = vmatpush1.msra.mxu0 0.0
        %390 = vmatprep.subr.mxu0 0.0
        %391 = vmatpush1.msra.mxu0 0.0
        %392 = vmatprep.subr.mxu0 0.0
        %393 = vmatpush1.msra.mxu0 0.0
        %394 = vmatprep.subr.mxu0 0.0
        %395 = vmatpush1.msra.mxu0 0.0
        %396 = vmatprep.subr.mxu0 0.0
        %397 = vmatpush1.msra.mxu0 0.0
        %398 = vmatprep.subr.mxu0 0.0
        %399 = vmatpush1.msra.mxu0 0.0
        %400 = vmatprep.subr.mxu0 0.0
        %401 = vmatpush1.msra.mxu0 0.0
        %402 = vmatprep.subr.mxu0 0.0
        %403 = vmatpush1.msra.mxu0 0.0
        %404 = vmatprep.subr.mxu0 0.0
        %405 = vmatpush1.msra.mxu0 0.0
        %406 = vmatprep.subr.mxu0 0.0
        %407 = vmatpush1.msra.mxu0 0.0
        %408 = vmatprep.subr.mxu0 0.0
        %409 = vmatpush1.msra.mxu0 0.0
        %410 = vmatprep.subr.mxu0 0.0
        %411 = vmatpush1.msra.mxu0 0.0
        %412 = vmatprep.subr.mxu0 0.0
        %413 = vmatpush1.msra.mxu0 0.0
        %414 = vmatprep.subr.mxu0 0.0
        %415 = vmatpush1.msra.mxu0 0.0
        %416 = vmatprep.subr.mxu0 0.0
        %417 = vmatpush1.msra.mxu0 0.0
        %418 = vmatprep.subr.mxu0 0.0
        %419 = vmatpush1.msra.mxu0 0.0
        %420 = vmatprep.subr.mxu0 0.0
        %421 = vmatpush1.msra.mxu0 0.0
        %422 = vmatprep.subr.mxu0 0.0
        %423 = vmatpush1.msra.mxu0 0.0
        %424 = vmatprep.subr.mxu0 0.0
        %425 = vmatpush1.msra.mxu0 0.0
        %426 = vmatprep.subr.mxu0 0.0
        %427 = vmatpush1.msra.mxu0 0.0
        %428 = vmatprep.subr.mxu0 0.0
        %429 = vmatpush1.msra.mxu0 0.0
        %430 = vmatprep.subr.mxu0 0.0
        %431 = vmatpush1.msra.mxu0 0.0
        %432 = vmatprep.subr.mxu0 0.0
        %433 = vmatpush1.msra.mxu0 0.0
        %434 = vmatprep.subr.mxu0 0.0
        %435 = vmatpush1.msra.mxu0 0.0
        %436 = vmatprep.subr.mxu0 0.0
        %437 = vmatpush1.msra.mxu0 0.0
        %438 = vmatprep.subr.mxu0 0.0
        %439 = vmatpush1.msra.mxu0 0.0
        %440 = vmatprep.subr.mxu0 0.0
        %441 = vmatpush1.msra.mxu0 0.0
        %442 = vmatprep.subr.mxu0 0.0
        %443 = vmatpush1.msra.mxu0 0.0
        %444 = vmatprep.mubr.f32.mxu0 0.0
        %445 = vmatmul.mubr.f32.gmra.mrb[0].mxu0 %v378
        %v446 = vpop.f32.mrb[0].mxu0
        %v447 = vadd.f32 %v374, %v446
        %v448 = vpop.f32.mrb[0].mxu0
        %v449 = vadd.f32 %v374, %v448
        %450 = vdwg.mxu0
        %451 = vst [vmem:[%s217] sm:$0xff] %v447
        %452 = vst [vmem:[%s217 + $0x8] sm:$0xff] %v449
        %s453 = sand.u32 %s137, 1
        %s454 = scalar_lea.sflag [#allocation3], %s453
        %s455 = sand.u32 %s137, 1
        %s456 = smul.addr %s455, 16
        %s457 = scalar_lea.vmem [#allocation2], %s456
        // Predicated region
        $region41: #{pointwise_head.1} parent=39 // pred_check
          %p458 = pneg %p147
        $region42: #{pointwise_head.1} parent=39 // pred_check_branch
          %460 = sbr.rel (%p458) target = $region44
        $region43: #{pointwise_head.1} parent=39 // pred_region
          %s462 = ssub.s32 256, 256
          %463 = vsyncadd %s454, %s462
          %s464 = smul.addr %s19, 2
          %s465 = smul.addr %s464, 128
          %s466 = scalar_lea.hbm %s5, %s465
          %s468 = sshll.u32 %s457, 4
          %s469 = int_to_ptr.vmem [resolvable:$true] %s468
          %471 = dma.vmem_to_hbm [thread:$0]  %s469, 256, %s466, %s454
        $region44: #{pointwise_head.1} parent=39 // pred_fallthru
          _
      $region40: #{pointwise_head.1} parent=5 // pred_fallthru
        _
      %p472 = scmp.le.s32.totalorder 2, %s14
      // Predicated region
      $region45: #{pointwise_head.1} parent=5 // pred_check
        %p473 = pneg %p472
      $region46: #{pointwise_head.1} parent=5 // pred_check_branch
        %475 = sbr.rel (%p473) target = $region48
      $region47: #{pointwise_head.1} parent=5 // pred_region
        %s476 = ssub.s32 %s14, 2
        // Predicated region
        $region49: #{pointwise_head.1} parent=47 // pred_check
          %p477 = pneg %p153
        $region50: #{pointwise_head.1} parent=47 // pred_check_branch
          %479 = sbr.rel (%p477) target = $region52
        $region51: #{pointwise_head.1} parent=47 // pred_region
          %s480 = sand.u32 %s138, 1
          %s481 = scalar_lea.sflag [#allocation3], %s480
          %s482 = sand.u32 %s138, 1
          %s483 = smul.addr %s482, 16
          %s484 = scalar_lea.vmem [#allocation2], %s483
          %485 = dma.done %s481, 256
        $region52: #{pointwise_head.1} parent=47 // pred_fallthru
          _
      $region48: #{pointwise_head.1} parent=5 // pred_fallthru
        _
    $region6: #{pointwise_head.1} parent=1 // loop_footer
      %s18 = sadd.s32 1, %s14
    $region7: #{pointwise_head.1} parent=1 // loop_footer_branch
      %13 = sbr.rel target = $region3
    $region8: #{pointwise_head.1} parent=1 // loop_exit
      _
    %486 = vsyncpa [#allocation3], 1
    %s487 = scalar_lea.sflag [#allocation3], 1
    %488 = vsyncpa %s487, 1

</llo_original>
